<compile_context>
chip_gen: v6e
topology: v6e:2x2x1
jax: 0.10.0
libtpu: 0.0.40
codegen_flags: <defaults>
</compile_context>

<pallas_src>
import functools

import jax
import jax.numpy as jnp
from jax.experimental import pallas as pl
from jax.experimental.pallas import tpu as pltpu


def _round_up(n, m):
    return ((n + m - 1) // m) * m


def pick_act_dtype():
    """bf16 activation math on chips with bf16 VPU/EUP (v6e/v7x); f32 otherwise."""
    try:
        kind = jax.devices()[0].device_kind.lower()
    except Exception:
        return jnp.float32
    if "v6" in kind or "v7" in kind:
        return jnp.bfloat16
    return jnp.float32


def mlp_kernel(x_ref, a1_ref, c1_ref, a2_ref, c2_ref, a3_ref, c3_ref, o_ref, *,
               act_dtype):
    # fc1 (sigmoid scale pre-folded into A1/c1): bf16 MXU, f32 accumulate,
    # single bias-add + tanh in act_dtype (bf16 on v6e/v7x, f32 on v5e).
    x = x_ref[...].astype(jnp.bfloat16)
    u1 = jnp.dot(x, a1_ref[...], preferred_element_type=jnp.float32)
    t1 = jnp.tanh(u1.astype(act_dtype) + c1_ref[...])

    # fc2, same folding; t1 is already bf16 on v6e/v7x so no extra recast.
    u2 = jnp.dot(t1.astype(jnp.bfloat16), a2_ref[...],
                 preferred_element_type=jnp.float32)
    t2 = jnp.tanh(u2.astype(act_dtype) + c2_ref[...])

    # fc3 (256 -> 1) on the VPU/XLU: weight-row multiply + lane reduce,
    # avoiding a 1-output-column MXU matmul.  Folded scale/offset in a3/c3.
    z3 = jnp.sum(t2.astype(jnp.float32) * a3_ref[...], axis=-1,
                 keepdims=True) + c3_ref[...]

    # Only the (tb, 1) final output keeps the full sigmoid.
    o_ref[...] = (0.5 * (jnp.tanh(0.5 * z3) + 1.0)).astype(o_ref.dtype)


def prediction_abonent_forward(x, params, block_batch=4096):
    """Forward pass of PredictionAbonent. x: (B, 44) float32 -> (B, 1) float32."""
    a1, c1, a2, c2, a3, c3 = params
    B, F = x.shape
    act_dtype = c1.dtype

    # Batch tile: multiple of 8 sublanes, capped by block_batch; ensure >= 2
    # grid steps when possible so megacore (v7x) has work on both cores.
    tb = min(block_batch, _round_up(B, 8))
    if pl.cdiv(B, tb) < 2 and B > 8:
        tb = _round_up(pl.cdiv(B, 2), 8)
    grid = (pl.cdiv(B, tb),)

    kernel = functools.partial(mlp_kernel, act_dtype=act_dtype)
    resident = lambda shape: pl.BlockSpec(shape, lambda i: (0, 0))

    out = pl.pallas_call(
        kernel,
        out_shape=jax.ShapeDtypeStruct((B, 1), jnp.float32),
        grid=grid,
        in_specs=[
            pl.BlockSpec((tb, F), lambda i: (i, 0)),   # x: tiled over batch
            resident(a1.shape),
            resident(c1.shape),
            resident(a2.shape),
            resident(c2.shape),
            resident(a3.shape),
            resident(c3.shape),
        ],
        out_specs=pl.BlockSpec((tb, 1), lambda i: (i, 0)),
        compiler_params=pltpu.CompilerParams(
            dimension_semantics=("parallel",),   # megacore sharding on v7x
            vmem_limit_bytes=48 << 20,           # fits v5e/v6e (128 MiB) & v7x (64 MiB)
        ),
    )(x, a1, c1, a2, c2, a3, c3)
    return out


def init_raw_params(key, hidden_neurons=400):
    """PyTorch-layout f32 params with nn.Linear default init U[-1/sqrt(fan_in), ...]."""
    h1, h2 = hidden_neurons, hidden_neurons - 200
    ks = jax.random.split(key, 6)

    def uni(k, shape, fan_in):
        bound = 1.0 / float(fan_in) ** 0.5
        return jax.random.uniform(k, shape, minval=-bound, maxval=bound,
                                  dtype=jnp.float32)

    W1 = uni(ks[0], (h1, 44), 44)
    b1 = uni(ks[1], (h1,), 44)
    W2 = uni(ks[2], (h2, h1), h1)
    b2 = uni(ks[3], (h2,), h1)
    W3 = uni(ks[4], (1, h2), h2)
    b3 = uni(ks[5], (1,), h2)
    return (W1, b1, W2, b2, W3, b3)


def fold_params(raw, act_dtype=jnp.float32):
    """Fold sigmoid(u)=0.5*tanh(0.5*u)+0.5 into weights/biases, transpose to
    (in, out), zero-pad hidden dims to lane multiples (400->512, 200->256)."""
    W1, b1, W2, b2, W3, b3 = raw
    h1, h2 = W1.shape[0], W2.shape[0]
    H1, H2 = _round_up(h1, 128), _round_up(h2, 128)

    # layer 1: t1 = tanh(x @ (0.5*W1^T) + 0.5*b1);  h1 = 0.5*t1 + 0.5
    A1 = 0.5 * W1.T                                       # (44, h1)
    c1 = 0.5 * b1                                         # (h1,)
    # layer 2: t2 = tanh(t1 @ (0.25*W2^T) + 0.25*rowsum(W2) + 0.5*b2)
    A2 = 0.25 * W2.T                                      # (h1, h2)
    c2 = 0.25 * jnp.sum(W2, axis=1) + 0.5 * b2            # (h2,)
    # layer 3: z3 = t2 . (0.5*W3) + 0.5*sum(W3) + b3;  out = sigmoid(z3)
    a3 = 0.5 * W3[0]                                      # (h2,)
    c3 = 0.5 * jnp.sum(W3) + b3                           # (1,)

    # Zero-pad to aligned hidden dims: padded positions give tanh(0)=0 and meet
    # zero weight rows/columns, so they never affect the output.
    A1 = jnp.pad(A1, ((0, 0), (0, H1 - h1))).astype(jnp.bfloat16)
    c1 = jnp.pad(c1, (0, H1 - h1)).reshape(1, H1).astype(act_dtype)
    A2 = jnp.pad(A2, ((0, H1 - h1), (0, H2 - h2))).astype(jnp.bfloat16)
    c2 = jnp.pad(c2, (0, H2 - h2)).reshape(1, H2).astype(act_dtype)
    a3 = jnp.pad(a3, (0, H2 - h2)).reshape(1, H2).astype(jnp.float32)
    c3 = jnp.reshape(c3, (1, 1)).astype(jnp.float32)
    return (A1, c1, A2, c2, a3, c3)


def reference_forward(x, raw_params):
    """Exact f32 reference of the original PyTorch forward()."""
    W1, b1, W2, b2, W3, b3 = raw_params
    h1 = jax.nn.sigmoid(x @ W1.T + b1)
    h2 = jax.nn.sigmoid(h1 @ W2.T + b2)
    z3 = h2 @ W3.T + b3
    return jax.nn.sigmoid(z3)


if __name__ == "__main__":
    key = jax.random.PRNGKey(0)
    k_param, k_x = jax.random.split(key)

    hidden_neurons = 400
    B = 64  # small batch
    raw = init_raw_params(k_param, hidden_neurons)
    act_dtype = pick_act_dtype()
    params = fold_params(raw, act_dtype)

    x = jax.random.normal(k_x, (B, 44), dtype=jnp.float32)

    out = prediction_abonent_forward(x, params)
    out = jax.block_until_ready(out)

    ref = reference_forward(x, raw)
    assert out.shape == (B, 1), out.shape
    max_err = float(jnp.max(jnp.abs(out - ref)))
    # bf16 MXU inputs (+ bf16 activations on v6e/v7x) vs. exact f32 reference.
    assert max_err < 2e-2, f"mismatch vs reference: max abs err {max_err}"

    # TODO(synk): `inference()` applies Softmax(dim=1) over a size-1 feature dim
    # (always returns 1.0); only forward() semantics are implemented in the kernel.
    print("KERNEL_OK")
</pallas_src>

<mosaic_0001>
module attributes {stable_mosaic.version = 11 : i64} {
  func.func @mlp_kernel(%arg0: i32, %arg1: memref<32x44xf32, #tpu.memory_space<vmem>>, %arg2: memref<44x512xbf16, #tpu.memory_space<vmem>>, %arg3: memref<1x512xf32, #tpu.memory_space<vmem>>, %arg4: memref<512x256xbf16, #tpu.memory_space<vmem>>, %arg5: memref<1x256xf32, #tpu.memory_space<vmem>>, %arg6: memref<1x256xf32, #tpu.memory_space<vmem>>, %arg7: memref<1x1xf32, #tpu.memory_space<vmem>>, %arg8: memref<32x1xf32, #tpu.memory_space<vmem>>) attributes {dimension_semantics = [#tpu.dimension_semantics<parallel>], iteration_bounds = array<i64: 2>, scalar_prefetch = 0 : i64, scratch_operands = 0 : i64, tpu.core_type = #tpu.core_type<tc>, window_params = [{transform_indices = @transform_0, window_bounds = array<i64: 32, 44>}, {pipeline_mode = #tpu.pipeline_mode<synchronous>, transform_indices = @transform_1, window_bounds = array<i64: 44, 512>}, {pipeline_mode = #tpu.pipeline_mode<synchronous>, transform_indices = @transform_2, window_bounds = array<i64: 1, 512>}, {pipeline_mode = #tpu.pipeline_mode<synchronous>, transform_indices = @transform_3, window_bounds = array<i64: 512, 256>}, {pipeline_mode = #tpu.pipeline_mode<synchronous>, transform_indices = @transform_4, window_bounds = array<i64: 1, 256>}, {pipeline_mode = #tpu.pipeline_mode<synchronous>, transform_indices = @transform_5, window_bounds = array<i64: 1, 256>}, {pipeline_mode = #tpu.pipeline_mode<synchronous>, transform_indices = @transform_6, window_bounds = array<i64: 1, 1>}, {transform_indices = @transform_7, window_bounds = array<i64: 32, 1>}]} {
    %c0 = arith.constant 0 : index
    %c0_0 = arith.constant 0 : index
    %0 = vector.load %arg1[%c0, %c0_0] : memref<32x44xf32, #tpu.memory_space<vmem>>, vector<32x44xf32>
    %1 = arith.truncf %0 : vector<32x44xf32> to vector<32x44xbf16>
    %c0_1 = arith.constant 0 : index
    %c0_2 = arith.constant 0 : index
    %2 = vector.load %arg2[%c0_1, %c0_2] : memref<44x512xbf16, #tpu.memory_space<vmem>>, vector<44x512xbf16>
    %cst = arith.constant dense<0.000000e+00> : vector<32x512xf32>
    %3 = tpu.matmul %1, %2, %cst {dimension_numbers = #tpu.dot_dimension_numbers<[1], [0], [0], [1], [0, 0, 1, 1], [], []>} : vector<32x44xbf16>, vector<44x512xbf16>, vector<32x512xf32> -> vector<32x512xf32>
    %c0_3 = arith.constant 0 : index
    %c0_4 = arith.constant 0 : index
    %4 = vector.load %arg3[%c0_3, %c0_4] : memref<1x512xf32, #tpu.memory_space<vmem>>, vector<1x512xf32>
    %5 = vector.broadcast %4 : vector<1x512xf32> to vector<32x512xf32>
    %6 = arith.addf %3, %5 : vector<32x512xf32>
    %7 = math.tanh %6 : vector<32x512xf32>
    %8 = arith.truncf %7 : vector<32x512xf32> to vector<32x512xbf16>
    %c0_5 = arith.constant 0 : index
    %c0_6 = arith.constant 0 : index
    %9 = vector.load %arg4[%c0_5, %c0_6] : memref<512x256xbf16, #tpu.memory_space<vmem>>, vector<512x256xbf16>
    %cst_7 = arith.constant dense<0.000000e+00> : vector<32x256xf32>
    %10 = tpu.matmul %8, %9, %cst_7 {dimension_numbers = #tpu.dot_dimension_numbers<[1], [0], [0], [1], [0, 0, 1, 1], [], []>} : vector<32x512xbf16>, vector<512x256xbf16>, vector<32x256xf32> -> vector<32x256xf32>
    %c0_8 = arith.constant 0 : index
    %c0_9 = arith.constant 0 : index
    %11 = vector.load %arg5[%c0_8, %c0_9] : memref<1x256xf32, #tpu.memory_space<vmem>>, vector<1x256xf32>
    %12 = vector.broadcast %11 : vector<1x256xf32> to vector<32x256xf32>
    %13 = arith.addf %10, %12 : vector<32x256xf32>
    %14 = math.tanh %13 : vector<32x256xf32>
    %c0_10 = arith.constant 0 : index
    %c0_11 = arith.constant 0 : index
    %15 = vector.load %arg6[%c0_10, %c0_11] : memref<1x256xf32, #tpu.memory_space<vmem>>, vector<1x256xf32>
    %16 = vector.broadcast %15 : vector<1x256xf32> to vector<32x256xf32>
    %17 = arith.mulf %14, %16 : vector<32x256xf32>
    %cst_12 = arith.constant dense<0.000000e+00> : vector<32xf32>
    %18 = vector.multi_reduction <add>, %17, %cst_12 [1] : vector<32x256xf32> to vector<32xf32>
    %19 = vector.shape_cast %18 : vector<32xf32> to vector<32x1xf32>
    %c0_13 = arith.constant 0 : index
    %c0_14 = arith.constant 0 : index
    %20 = vector.load %arg7[%c0_13, %c0_14] : memref<1x1xf32, #tpu.memory_space<vmem>>, vector<1x1xf32>
    %21 = vector.broadcast %20 : vector<1x1xf32> to vector<32x1xf32>
    %22 = arith.addf %19, %21 : vector<32x1xf32>
    %cst_15 = arith.constant 5.000000e-01 : f32
    %23 = vector.broadcast %cst_15 : f32 to vector<32x1xf32>
    %24 = arith.mulf %23, %22 : vector<32x1xf32>
    %25 = math.tanh %24 : vector<32x1xf32>
    %cst_16 = arith.constant 1.000000e+00 : f32
    %26 = vector.broadcast %cst_16 : f32 to vector<32x1xf32>
    %27 = arith.addf %25, %26 : vector<32x1xf32>
    %cst_17 = arith.constant 5.000000e-01 : f32
    %28 = vector.broadcast %cst_17 : f32 to vector<32x1xf32>
    %29 = arith.mulf %28, %27 : vector<32x1xf32>
    %c0_18 = arith.constant 0 : index
    %c0_19 = arith.constant 0 : index
    %30 = vector.load %arg8[%c0_18, %c0_19] : memref<32x1xf32, #tpu.memory_space<vmem>>, vector<32x1xf32>
    tpu.vector_store %arg8[%c0_18, %c0_19], %29 {strides = array<i32>} : memref<32x1xf32, #tpu.memory_space<vmem>>, vector<32x1xf32>,
    return
  }
  func.func @transform_0(%arg0: i32) -> (i32, i32) {
    %c0_i32 = arith.constant 0 : i32
    %c0_i32_0 = arith.constant 0 : i32
    return %arg0, %c0_i32 : i32, i32
  }
  func.func @transform_1(%arg0: i32) -> (i32, i32) {
    %c0_i32 = arith.constant 0 : i32
    %c0_i32_0 = arith.constant 0 : i32
    %c0_i32_1 = arith.constant 0 : i32
    return %c0_i32, %c0_i32_0 : i32, i32
  }
  func.func @transform_2(%arg0: i32) -> (i32, i32) {
    %c0_i32 = arith.constant 0 : i32
    %c0_i32_0 = arith.constant 0 : i32
    %c0_i32_1 = arith.constant 0 : i32
    return %c0_i32, %c0_i32_0 : i32, i32
  }
  func.func @transform_3(%arg0: i32) -> (i32, i32) {
    %c0_i32 = arith.constant 0 : i32
    %c0_i32_0 = arith.constant 0 : i32
    %c0_i32_1 = arith.constant 0 : i32
    return %c0_i32, %c0_i32_0 : i32, i32
  }
  func.func @transform_4(%arg0: i32) -> (i32, i32) {
    %c0_i32 = arith.constant 0 : i32
    %c0_i32_0 = arith.constant 0 : i32
    %c0_i32_1 = arith.constant 0 : i32
    return %c0_i32, %c0_i32_0 : i32, i32
  }
  func.func @transform_5(%arg0: i32) -> (i32, i32) {
    %c0_i32 = arith.constant 0 : i32
    %c0_i32_0 = arith.constant 0 : i32
    %c0_i32_1 = arith.constant 0 : i32
    return %c0_i32, %c0_i32_0 : i32, i32
  }
  func.func @transform_6(%arg0: i32) -> (i32, i32) {
    %c0_i32 = arith.constant 0 : i32
    %c0_i32_0 = arith.constant 0 : i32
    %c0_i32_1 = arith.constant 0 : i32
    return %c0_i32, %c0_i32_0 : i32, i32
  }
  func.func @transform_7(%arg0: i32) -> (i32, i32) {
    %c0_i32 = arith.constant 0 : i32
    %c0_i32_0 = arith.constant 0 : i32
    return %arg0, %c0_i32 : i32, i32
  }
}

</mosaic_0001>

<llo_original>
// kernel: tpu_custom_call.1
$region0: #{tpu_custom_call.1}
  #allocation0 [shape = 'u32[]', space=smem, size = 0x4, offset = 0x4, fixed_abs, tag = 'smem constant byte address 0x4 - core index']
  #allocation1 [shape = 'u32[144,128]{1,0:T(1,128)}', space=vmem, size = 0x12000, scoped, tag = 'internal scratch']
  #allocation2 [shape = 'f32[1,1]{1,0:T(1,128)S(1)}', space=vmem, size = 0x200, scoped, tag = 'scoped memory for tpu_custom_call.1']
  %s0 = inlined_call_operand.vmem [shape: f32[64,44], index: 0, kind: input, shape index: {}]
  %s1 = inlined_call_operand.vmem [shape: bf16[44,512], index: 1, kind: input, shape index: {}]
  %s2 = inlined_call_operand.vmem [shape: f32[1,512], index: 2, kind: input, shape index: {}]
  %s3 = inlined_call_operand.hbm [shape: bf16[512,256], index: 3, kind: input, shape index: {}]
  %s4 = inlined_call_operand.vmem [shape: f32[1,256], index: 4, kind: input, shape index: {}]
  %s5 = inlined_call_operand.vmem [shape: f32[1,256], index: 5, kind: input, shape index: {}]
  %s6 = inlined_call_operand.<no memory space> [shape: f32[1,1], index: 6, kind: input, shape index: {}]
  %s7 = inlined_call_operand.vmem [shape: f32[64,1], index: 7, kind: output, shape index: {}]
  %s8 = sld [smem:[#allocation0]]
  $region65: #{tpu_custom_call.1} parent=0
    _
  %s10 = ssub.s32 1, %s8
  %s11 = scalar_select 0, %s10, %s8
  %v12 = vstv %s6
  %13 = vst [vmem:[#allocation2] sm:$0x1] %v12
  $region1: #{tpu_custom_call.1} parent=0
    #allocation3 [shape = 'u8[262144]{0}', space=vmem, size = 0x40000, scoped, tag = 'input window, operand 3, single buffered']
    #allocation4 [shape = 's32[2]{0}', space=sflag, size = 0x8, scoped, tag = 'scoped memory for tpu_custom_call.1']
    %14 = vsyncpa [#allocation4], 0
    loop: start=0, step=1, limit=4
    $region2: #{tpu_custom_call.1} parent=1 // loop_pre_header
      _
    $region3: #{tpu_custom_call.1} parent=1 // loop_header
      %s16 = sphi 0, %s20
      %p17 = scmp.ge.s32.totalorder %s16, 4
      %s26 = sphi 0, %s28
      %s29 = sphi 0, %s26
      %s30 = sphi 0, %s29
      %s46 = sphi 0, %s30
      %s50 = sphi 0, %s50
      %s52 = sphi 0, %s50
      %s53 = sphi 0, %s52
      %s67 = sphi 0, %s53
      %s71 = sphi 0, %s71
      %s73 = sphi 0, %s71
      %s74 = sphi 0, %s73
      %s88 = sphi 0, %s74
      %s92 = sphi 0, %s92
      %s94 = sphi 0, %s92
      %s95 = sphi 0, %s94
      %s109 = sphi 0, %s95
      %s113 = sphi 0, %s113
      %s115 = sphi 0, %s113
      %s116 = sphi 0, %s115
      %s130 = sphi 0, %s116
      %s134 = sphi 0, %s134
      %s136 = sphi 0, %s134
      %s137 = sphi 0, %s136
      %s151 = sphi 0, %s137
      %s155 = sphi 0, %s155
      %s157 = sphi 0, %s155
      %s158 = sphi 0, %s157
      %s172 = sphi 0, %s158
      %s178 = sphi 0, %s180
      %s181 = sphi 0, %s178
      %s182 = sphi 0, %s181
      %s198 = sphi 0, %s182
    $region4: #{tpu_custom_call.1} parent=1 // loop_header_branch
      %19 = sbr.rel (%p17) target = $region8
    $region5: #{tpu_custom_call.1} parent=1 // loop_body
      %s21 = ssub.s32 %s16, 1
      %s22 = ssub.s32 %s16, 2
      %s23 = sadd.s32 %s16, 1
      %s24 = ssub.s32 %s16, %s23
      %p25 = scmp.eq.s32.totalorder %s24, 0
      %s27 = sadd.s32 %s26, 1
      %s28 = scalar_select %p25, %s26, %s27
      %p31 = pneg %p25
      %p32 = scmp.eq.s32.totalorder %s16, 1
      %p33 = por %p31, %p32
      %p34 = scmp.ne.s32.totalorder %s26, %s29
      %p35 = scmp.eq.s32.totalorder %s16, 0
      %p36 = por %p34, %p35
      %p37 = scmp.ne.s32.totalorder %s26, %s29
      %p38 = scmp.eq.s32.totalorder %s21, 1
      %p39 = por %p37, %p38
      %p40 = scmp.ne.s32.totalorder %s29, %s30
      %p41 = scmp.eq.s32.totalorder %s21, 0
      %p42 = por %p40, %p41
      %p43 = scmp.ne.s32.totalorder %s29, %s30
      %p44 = scmp.eq.s32.totalorder %s22, 1
      %p45 = por %p43, %p44
      %p47 = scmp.ne.s32.totalorder %s30, %s46
      %p48 = scmp.eq.s32.totalorder %s22, 0
      %p49 = por %p47, %p48
      %s51 = sadd.s32 %s50, 1
      %p54 = scmp.eq.s32.totalorder %s16, 1
      %p55 = scmp.ne.s32.totalorder %s50, %s52
      %p56 = scmp.eq.s32.totalorder %s16, 0
      %p57 = por %p55, %p56
      %p58 = scmp.ne.s32.totalorder %s50, %s52
      %p59 = scmp.eq.s32.totalorder %s21, 1
      %p60 = por %p58, %p59
      %p61 = scmp.ne.s32.totalorder %s52, %s53
      %p62 = scmp.eq.s32.totalorder %s21, 0
      %p63 = por %p61, %p62
      %p64 = scmp.ne.s32.totalorder %s52, %s53
      %p65 = scmp.eq.s32.totalorder %s22, 1
      %p66 = por %p64, %p65
      %p68 = scmp.ne.s32.totalorder %s53, %s67
      %p69 = scmp.eq.s32.totalorder %s22, 0
      %p70 = por %p68, %p69
      %s72 = sadd.s32 %s71, 1
      %p75 = scmp.eq.s32.totalorder %s16, 1
      %p76 = scmp.ne.s32.totalorder %s71, %s73
      %p77 = scmp.eq.s32.totalorder %s16, 0
      %p78 = por %p76, %p77
      %p79 = scmp.ne.s32.totalorder %s71, %s73
      %p80 = scmp.eq.s32.totalorder %s21, 1
      %p81 = por %p79, %p80
      %p82 = scmp.ne.s32.totalorder %s73, %s74
      %p83 = scmp.eq.s32.totalorder %s21, 0
      %p84 = por %p82, %p83
      %p85 = scmp.ne.s32.totalorder %s73, %s74
      %p86 = scmp.eq.s32.totalorder %s22, 1
      %p87 = por %p85, %p86
      %p89 = scmp.ne.s32.totalorder %s74, %s88
      %p90 = scmp.eq.s32.totalorder %s22, 0
      %p91 = por %p89, %p90
      %s93 = sadd.s32 %s92, 1
      %p96 = scmp.eq.s32.totalorder %s16, 1
      %p97 = scmp.ne.s32.totalorder %s92, %s94
      %p98 = scmp.eq.s32.totalorder %s16, 0
      %p99 = por %p97, %p98
      %p100 = scmp.ne.s32.totalorder %s92, %s94
      %p101 = scmp.eq.s32.totalorder %s21, 1
      %p102 = por %p100, %p101
      %p103 = scmp.ne.s32.totalorder %s94, %s95
      %p104 = scmp.eq.s32.totalorder %s21, 0
      %p105 = por %p103, %p104
      %p106 = scmp.ne.s32.totalorder %s94, %s95
      %p107 = scmp.eq.s32.totalorder %s22, 1
      %p108 = por %p106, %p107
      %p110 = scmp.ne.s32.totalorder %s95, %s109
      %p111 = scmp.eq.s32.totalorder %s22, 0
      %p112 = por %p110, %p111
      %s114 = sadd.s32 %s113, 1
      %p117 = scmp.eq.s32.totalorder %s16, 1
      %p118 = scmp.ne.s32.totalorder %s113, %s115
      %p119 = scmp.eq.s32.totalorder %s16, 0
      %p120 = por %p118, %p119
      %p121 = scmp.ne.s32.totalorder %s113, %s115
      %p122 = scmp.eq.s32.totalorder %s21, 1
      %p123 = por %p121, %p122
      %p124 = scmp.ne.s32.totalorder %s115, %s116
      %p125 = scmp.eq.s32.totalorder %s21, 0
      %p126 = por %p124, %p125
      %p127 = scmp.ne.s32.totalorder %s115, %s116
      %p128 = scmp.eq.s32.totalorder %s22, 1
      %p129 = por %p127, %p128
      %p131 = scmp.ne.s32.totalorder %s116, %s130
      %p132 = scmp.eq.s32.totalorder %s22, 0
      %p133 = por %p131, %p132
      %s135 = sadd.s32 %s134, 1
      %p138 = scmp.eq.s32.totalorder %s16, 1
      %p139 = scmp.ne.s32.totalorder %s134, %s136
      %p140 = scmp.eq.s32.totalorder %s16, 0
      %p141 = por %p139, %p140
      %p142 = scmp.ne.s32.totalorder %s134, %s136
      %p143 = scmp.eq.s32.totalorder %s21, 1
      %p144 = por %p142, %p143
      %p145 = scmp.ne.s32.totalorder %s136, %s137
      %p146 = scmp.eq.s32.totalorder %s21, 0
      %p147 = por %p145, %p146
      %p148 = scmp.ne.s32.totalorder %s136, %s137
      %p149 = scmp.eq.s32.totalorder %s22, 1
      %p150 = por %p148, %p149
      %p152 = scmp.ne.s32.totalorder %s137, %s151
      %p153 = scmp.eq.s32.totalorder %s22, 0
      %p154 = por %p152, %p153
      %s156 = sadd.s32 %s155, 1
      %p159 = scmp.eq.s32.totalorder %s16, 1
      %p160 = scmp.ne.s32.totalorder %s155, %s157
      %p161 = scmp.eq.s32.totalorder %s16, 0
      %p162 = por %p160, %p161
      %p163 = scmp.ne.s32.totalorder %s155, %s157
      %p164 = scmp.eq.s32.totalorder %s21, 1
      %p165 = por %p163, %p164
      %p166 = scmp.ne.s32.totalorder %s157, %s158
      %p167 = scmp.eq.s32.totalorder %s21, 0
      %p168 = por %p166, %p167
      %p169 = scmp.ne.s32.totalorder %s157, %s158
      %p170 = scmp.eq.s32.totalorder %s22, 1
      %p171 = por %p169, %p170
      %p173 = scmp.ne.s32.totalorder %s158, %s172
      %p174 = scmp.eq.s32.totalorder %s22, 0
      %p175 = por %p173, %p174
      %s176 = ssub.s32 %s16, %s23
      %p177 = scmp.eq.s32.totalorder %s176, 0
      %s179 = sadd.s32 %s178, 1
      %s180 = scalar_select %p177, %s178, %s179
      %p183 = pneg %p177
      %p184 = scmp.eq.s32.totalorder %s16, 1
      %p185 = por %p183, %p184
      %p186 = scmp.ne.s32.totalorder %s178, %s181
      %p187 = scmp.eq.s32.totalorder %s16, 0
      %p188 = por %p186, %p187
      %p189 = scmp.ne.s32.totalorder %s178, %s181
      %p190 = scmp.eq.s32.totalorder %s21, 1
      %p191 = por %p189, %p190
      %p192 = scmp.ne.s32.totalorder %s181, %s182
      %p193 = scmp.eq.s32.totalorder %s21, 0
      %p194 = por %p192, %p193
      %p195 = scmp.ne.s32.totalorder %s181, %s182
      %p196 = scmp.eq.s32.totalorder %s22, 1
      %p197 = por %p195, %p196
      %p199 = scmp.ne.s32.totalorder %s182, %s198
      %p200 = scmp.eq.s32.totalorder %s22, 0
      %p201 = por %p199, %p200
      %p202 = scmp.le.s32.totalorder 1, %s16
      %p203 = scmp.lt.s32.totalorder %s16, 3
      %p204 = pnand %p202, %p203
      %p205 = pneg %p204
      // Predicated region
      $region9: #{tpu_custom_call.1} parent=5 // pred_check
        _
      $region10: #{tpu_custom_call.1} parent=5 // pred_check_branch
        %207 = sbr.rel (%p204) target = $region12
      $region11: #{tpu_custom_call.1} parent=5 // pred_region
        %s208 = ssub.s32 %s16, 1
        // Predicated region
        $region13: #{tpu_custom_call.1} parent=11 // pred_check
          %p209 = pneg %p63
        $region14: #{tpu_custom_call.1} parent=11 // pred_check_branch
          %211 = sbr.rel (%p209) target = $region16
        $region15: #{tpu_custom_call.1} parent=11 // pred_region
          _
        $region16: #{tpu_custom_call.1} parent=11 // pred_fallthru
          _
        // Predicated region
        $region17: #{tpu_custom_call.1} parent=11 // pred_check
          %p212 = pneg %p84
        $region18: #{tpu_custom_call.1} parent=11 // pred_check_branch
          %214 = sbr.rel (%p212) target = $region20
        $region19: #{tpu_custom_call.1} parent=11 // pred_region
          _
        $region20: #{tpu_custom_call.1} parent=11 // pred_fallthru
          _
        // Predicated region
        $region21: #{tpu_custom_call.1} parent=11 // pred_check
          %p215 = pneg %p105
        $region22: #{tpu_custom_call.1} parent=11 // pred_check_branch
          %217 = sbr.rel (%p215) target = $region24
        $region23: #{tpu_custom_call.1} parent=11 // pred_region
          %s219 = ssub.s32 8192, 8192
          %220 = vsyncadd [#allocation4], %s219
          %s221 = sshll.u32 [#allocation3], 4
          %s222 = int_to_ptr.vmem [resolvable:$true] %s221
          %227 = dma.hbm_to_vmem [thread:$0]  %s3, 8192, %s222, [#allocation4], 128, 128, 8
        $region24: #{tpu_custom_call.1} parent=11 // pred_fallthru
          _
        // Predicated region
        $region25: #{tpu_custom_call.1} parent=11 // pred_check
          %p228 = pneg %p126
        $region26: #{tpu_custom_call.1} parent=11 // pred_check_branch
          %230 = sbr.rel (%p228) target = $region28
        $region27: #{tpu_custom_call.1} parent=11 // pred_region
          _
        $region28: #{tpu_custom_call.1} parent=11 // pred_fallthru
          _
        // Predicated region
        $region29: #{tpu_custom_call.1} parent=11 // pred_check
          %p231 = pneg %p147
        $region30: #{tpu_custom_call.1} parent=11 // pred_check_branch
          %233 = sbr.rel (%p231) target = $region32
        $region31: #{tpu_custom_call.1} parent=11 // pred_region
          _
        $region32: #{tpu_custom_call.1} parent=11 // pred_fallthru
          _
        // Predicated region
        $region33: #{tpu_custom_call.1} parent=11 // pred_check
          %p234 = pneg %p168
        $region34: #{tpu_custom_call.1} parent=11 // pred_check_branch
          %236 = sbr.rel (%p234) target = $region36
        $region35: #{tpu_custom_call.1} parent=11 // pred_region
          _
        $region36: #{tpu_custom_call.1} parent=11 // pred_fallthru
          _
      $region12: #{tpu_custom_call.1} parent=5 // pred_fallthru
        _
      %p237 = scmp.lt.s32.totalorder %s16, 2
      // Predicated region
      $region37: #{tpu_custom_call.1} parent=5 // pred_check
        %p238 = pneg %p237
      $region38: #{tpu_custom_call.1} parent=5 // pred_check_branch
        %240 = sbr.rel (%p238) target = $region40
      $region39: #{tpu_custom_call.1} parent=5 // pred_region
        // Predicated region
        $region41: #{tpu_custom_call.1} parent=39 // pred_check
          %p241 = pneg %p36
        $region42: #{tpu_custom_call.1} parent=39 // pred_check_branch
          %243 = sbr.rel (%p241) target = $region44
        $region43: #{tpu_custom_call.1} parent=39 // pred_region
          %s244 = smul.u32 4, %s16
          %p245 = scmp.lt.s32.totalorder %s244, 7
          %s246 = scalar_select %p245, %s244, 7
          %s247 = smul.addr %s246, 8
          %s248 = scalar_lea.vmem %s0, %s247
          %s249 = smul.u32 4, %s16
        $region44: #{tpu_custom_call.1} parent=39 // pred_fallthru
          _
      $region40: #{tpu_custom_call.1} parent=5 // pred_fallthru
        _
      %p250 = scmp.le.s32.totalorder 1, %s16
      %p251 = scmp.lt.s32.totalorder %s16, 3
      %p252 = pnand %p250, %p251
      %p253 = pneg %p252
      // Predicated region
      $region45: #{tpu_custom_call.1} parent=5 // pred_check
        _
      $region46: #{tpu_custom_call.1} parent=5 // pred_check_branch
        %255 = sbr.rel (%p252) target = $region48
      $region47: #{tpu_custom_call.1} parent=5 // pred_region
        %s256 = ssub.s32 %s16, 1
        // Predicated region
        $region49: #{tpu_custom_call.1} parent=47 // pred_check
          %p257 = pneg %p105
        $region50: #{tpu_custom_call.1} parent=47 // pred_check_branch
          %259 = sbr.rel (%p257) target = $region52
        $region51: #{tpu_custom_call.1} parent=47 // pred_region
          %260 = dma.done [#allocation4], 8192
        $region52: #{tpu_custom_call.1} parent=47 // pred_fallthru
          _
        %s261 = smul.u32 4, %s21
        %p262 = scmp.lt.s32.totalorder %s261, 7
        %s263 = scalar_select %p262, %s261, 7
        %s264 = smul.addr %s263, 8
        %s265 = scalar_lea.vmem %s0, %s264
        %p266 = pneg %p42
        %p267 = pneg %p39
        %p268 = pneg %p63
        %p269 = pneg %p60
        %p270 = pneg %p84
        %p271 = pneg %p81
        %p272 = pneg %p105
        %p273 = pneg %p102
        %p274 = pneg %p126
        %p275 = pneg %p123
        %p276 = pneg %p147
        %p277 = pneg %p144
        %p278 = pneg %p168
        %p279 = pneg %p165
        %p280 = pneg %p194
        %p281 = pneg %p191
        %s282 = smul.u32 4, %s21
        %p283 = scmp.lt.s32.totalorder %s282, 7
        %s284 = scalar_select %p283, %s282, 7
        %s285 = smul.addr %s284, 8
        %s286 = scalar_lea.vmem %s7, %s285
        %s287 = smul.u32 4, %s21
        %p288 = scmp.lt.s32.totalorder %s287, 7
        %s289 = scalar_select %p288, %s287, 7
        %s290 = smul.addr %s289, 8
        %s291 = scalar_lea.vmem %s0, %s290
        %s292 = smul.u32 4, %s21
        %s293 = smul.u32 4, %s21
        %p294 = scmp.lt.s32.totalorder %s293, 7
        %s295 = scalar_select %p294, %s293, 7
        %s296 = smul.addr %s295, 8
        %s297 = scalar_lea.vmem %s7, %s296
        %s298 = smul.u32 4, %s21
        %v300 = vld [vmem:[%s291] sm:$0xff]
        %v301 = vld [vmem:[%s291 + $0x8] sm:$0xff]
        %v302 = vld [vmem:[%s291 + $0x10] sm:$0xff]
        %v303 = vld [vmem:[%s291 + $0x18] sm:$0xff]
        %v304 = vpack.c.bf16 %v301, %v300
        %v305 = vpack.c.bf16 %v303, %v302
        %v306 = vld [vmem:[%s1] sm:$0xff]
        %v307 = vld [vmem:[%s1 + $0x8] sm:$0xff]
        %v308 = vld [vmem:[%s1 + $0x10] sm:$0xff]
        %v309 = vld [vmem:[%s1 + $0x18] sm:$0xff]
        %v310 = vld [vmem:[%s1 + $0x20] sm:$0xff]
        %v311 = vld [vmem:[%s1 + $0x28] sm:$0xff]
        %v312 = vld [vmem:[%s1 + $0x30] sm:$0xff]
        %v313 = vld [vmem:[%s1 + $0x38] sm:$0xff]
        %v314 = vld [vmem:[%s1 + $0x40] sm:$0xff]
        %v315 = vld [vmem:[%s1 + $0x48] sm:$0xff]
        %v316 = vld [vmem:[%s1 + $0x50] sm:$0x33]
        %v317 = vld [vmem:[%s1 + $0x58] sm:$0x33]
        %v318 = vld [vmem:[%s2] sm:$0xf]
        %v320 = vlaneseq
        %v321 = vshrl.u32 %v320, 7
        %v322 = vsub.s32 0, %v321
        %v323 = vrot.slane %v318, %v322
        %v324 = vlaneseq
        %v325 = vshrl.u32 %v324, 7
        %v326 = vsub.s32 1, %v325
        %v327 = vrot.slane %v318, %v326
        %v328 = vlaneseq
        %v329 = vshrl.u32 %v328, 7
        %v330 = vsub.s32 2, %v329
        %v331 = vrot.slane %v318, %v330
        %v332 = vlaneseq
        %v333 = vshrl.u32 %v332, 7
        %v334 = vsub.s32 3, %v333
        %v335 = vrot.slane %v318, %v334
        %v352 = vunpack.c.l.b16 %v306
        %v353 = vunpack.c.h.b16 %v306
        %v354 = vunpack.c.l.b16 %v307
        %v355 = vunpack.c.h.b16 %v307
        %v356 = vunpack.c.l.b16 %v308
        %v357 = vunpack.c.h.b16 %v308
        %v358 = vunpack.c.l.b16 %v309
        %v359 = vunpack.c.h.b16 %v309
        %v360 = vunpack.c.l.b16 %v310
        %v361 = vunpack.c.h.b16 %v310
        %v362 = vunpack.c.l.b16 %v311
        %v363 = vunpack.c.h.b16 %v311
        %v364 = vunpack.c.l.b16 %v312
        %v365 = vunpack.c.h.b16 %v312
        %v366 = vunpack.c.l.b16 %v313
        %v367 = vunpack.c.h.b16 %v313
        %v368 = vunpack.c.l.b16 %v314
        %v369 = vunpack.c.h.b16 %v314
        %v370 = vunpack.c.l.b16 %v315
        %v371 = vunpack.c.h.b16 %v315
        %v372 = vunpack.c.l.b16 %v316
        %v373 = vunpack.c.h.b16 %v316
        %v374 = vunpack.c.l.b16 %v317
        %v375 = vunpack.c.h.b16 %v317
        %v376 = vpack.c.b16 %v356, %v352
        %v377 = vpack.c.b16 %v357, %v353
        %v378 = vpack.c.b16 %v358, %v354
        %v379 = vpack.c.b16 %v359, %v355
        %v380 = vpack.c.b16 %v364, %v360
        %v381 = vpack.c.b16 %v365, %v361
        %v382 = vpack.c.b16 %v366, %v362
        %v383 = vpack.c.b16 %v367, %v363
        %v384 = vpack.c.b16 %v372, %v368
        %v385 = vpack.c.b16 %v373, %v369
        %v386 = vpack.c.b16 %v374, %v370
        %v387 = vpack.c.b16 %v375, %v371
        %vm396 = vcmask 359424
        %v398 = vsel %vm396, %v304, 0
        %v401 = vsel %vm396, %v305, 0
        %vm403 = vcmask 1045504
        %v405 = vsel %vm403, %v384, 0
        %v408 = vsel %vm403, %v385, 0
        %v411 = vsel %vm403, %v386, 0
        %v414 = vsel %vm403, %v387, 0
        %416 = vmatprep.subr.bf16.mxu0 0
        %417 = vmatpush1.bf16.msra.mxu0 0
        %418 = vmatprep.subr.bf16.mxu0 0
        %419 = vmatpush1.bf16.msra.mxu0 0
        %420 = vmatprep.subr.bf16.mxu0 0
        %421 = vmatpush1.bf16.msra.mxu0 0
        %422 = vmatprep.subr.bf16.mxu0 0
        %423 = vmatpush1.bf16.msra.mxu0 0
        %424 = vmatprep.subr.bf16.mxu0 0
        %425 = vmatpush1.bf16.msra.mxu0 0
        %426 = vmatprep.subr.bf16.mxu0 %v408
        %427 = vmatpush1.bf16.msra.mxu0 %v405
        %428 = vmatprep.subr.bf16.mxu0 %v381
        %429 = vmatpush1.bf16.msra.mxu0 %v380
        %430 = vmatprep.subr.bf16.mxu0 %v377
        %431 = vmatpush1.bf16.msra.mxu0 %v376
        %432 = vmatprep.subr.bf16.mxu0 0
        %433 = vmatpush2.bf16.msra.mxu0 0
        %434 = vmatprep.subr.bf16.mxu0 0
        %435 = vmatpush2.bf16.msra.mxu0 0
        %436 = vmatprep.subr.bf16.mxu0 0
        %437 = vmatpush2.bf16.msra.mxu0 0
        %438 = vmatprep.subr.bf16.mxu0 0
        %439 = vmatpush2.bf16.msra.mxu0 0
        %440 = vmatprep.subr.bf16.mxu0 0
        %441 = vmatpush2.bf16.msra.mxu0 0
        %442 = vmatprep.subr.bf16.mxu0 0
        %443 = vmatpush2.bf16.msra.mxu0 0
        %444 = vmatprep.subr.bf16.mxu0 0
        %445 = vmatpush2.bf16.msra.mxu0 0
        %446 = vmatprep.subr.bf16.mxu0 0
        %447 = vmatpush2.bf16.msra.mxu0 0
        %448 = vmatprep.mubr.bf16.mxu0 0
        %449 = vmatmul.mubr.bf16.gmra.mxu0 %v398
        %v450 = vpop.f32.mrf.mxu0
        %v451 = vadd.f32 %v323, %v450
        %v452 = vpop.f32.mrf.mxu0
        %v453 = vadd.f32 %v327, %v452
        %v454 = vpop.f32.mrf.mxu0
        %v455 = vadd.f32 %v323, %v454
        %v456 = vpop.f32.mrf.mxu0
        %v457 = vadd.f32 %v327, %v456
        %458 = vmatprep.mubr.bf16.mxu0 0
        %459 = vmatmul.mubr.bf16.gmra.mxu0 %v401
        %v460 = vpop.f32.mrf.mxu0
        %v461 = vadd.f32 %v323, %v460
        %v462 = vpop.f32.mrf.mxu0
        %v463 = vadd.f32 %v327, %v462
        %v464 = vpop.f32.mrf.mxu0
        %v465 = vadd.f32 %v323, %v464
        %v466 = vpop.f32.mrf.mxu0
        %v467 = vadd.f32 %v327, %v466
        %468 = vdwg.mxu0
        %469 = vmatprep.subr.bf16.mxu0 0
        %470 = vmatpush1.bf16.msra.mxu0 0
        %471 = vmatprep.subr.bf16.mxu0 0
        %472 = vmatpush1.bf16.msra.mxu0 0
        %473 = vmatprep.subr.bf16.mxu0 0
        %474 = vmatpush1.bf16.msra.mxu0 0
        %475 = vmatprep.subr.bf16.mxu0 0
        %476 = vmatpush1.bf16.msra.mxu0 0
        %477 = vmatprep.subr.bf16.mxu0 0
        %478 = vmatpush1.bf16.msra.mxu0 0
        %479 = vmatprep.subr.bf16.mxu0 %v414
        %480 = vmatpush1.bf16.msra.mxu0 %v411
        %481 = vmatprep.subr.bf16.mxu0 %v383
        %482 = vmatpush1.bf16.msra.mxu0 %v382
        %483 = vmatprep.subr.bf16.mxu0 %v379
        %484 = vmatpush1.bf16.msra.mxu0 %v378
        %485 = vmatprep.subr.bf16.mxu0 0
        %486 = vmatpush2.bf16.msra.mxu0 0
        %487 = vmatprep.subr.bf16.mxu0 0
        %488 = vmatpush2.bf16.msra.mxu0 0
        %489 = vmatprep.subr.bf16.mxu0 0
        %490 = vmatpush2.bf16.msra.mxu0 0
        %491 = vmatprep.subr.bf16.mxu0 0
        %492 = vmatpush2.bf16.msra.mxu0 0
        %493 = vmatprep.subr.bf16.mxu0 0
        %494 = vmatpush2.bf16.msra.mxu0 0
        %495 = vmatprep.subr.bf16.mxu0 0
        %496 = vmatpush2.bf16.msra.mxu0 0
        %497 = vmatprep.subr.bf16.mxu0 0
        %498 = vmatpush2.bf16.msra.mxu0 0
        %499 = vmatprep.subr.bf16.mxu0 0
        %500 = vmatpush2.bf16.msra.mxu0 0
        %501 = vmatprep.mubr.bf16.mxu0 0
        %502 = vmatmul.mubr.bf16.gmra.mxu0 %v398
        %v503 = vpop.f32.mrf.mxu0
        %v504 = vadd.f32 %v331, %v503
        %v505 = vpop.f32.mrf.mxu0
        %v506 = vadd.f32 %v335, %v505
        %v507 = vpop.f32.mrf.mxu0
        %v508 = vadd.f32 %v331, %v507
        %v509 = vpop.f32.mrf.mxu0
        %v510 = vadd.f32 %v335, %v509
        %511 = vmatprep.mubr.bf16.mxu0 0
        %512 = vmatmul.mubr.bf16.gmra.mxu0 %v401
        %v513 = vpop.f32.mrf.mxu0
        %v514 = vadd.f32 %v331, %v513
        %v515 = vpop.f32.mrf.mxu0
        %v516 = vadd.f32 %v335, %v515
        %v517 = vpop.f32.mrf.mxu0
        %v518 = vadd.f32 %v331, %v517
        %v519 = vpop.f32.mrf.mxu0
        %v520 = vadd.f32 %v335, %v519
        %521 = vdwg.mxu0
        %v522 = vtanh.pop %v451
        %v523 = vtanh.pop %v453
        %v524 = vtanh.pop %v504
        %v525 = vtanh.pop %v506
        %v526 = vtanh.pop %v455
        %v527 = vtanh.pop %v457
        %v528 = vtanh.pop %v508
        %v529 = vtanh.pop %v510
        %v530 = vtanh.pop %v461
        %v531 = vtanh.pop %v463
        %v532 = vtanh.pop %v514
        %v533 = vtanh.pop %v516
        %v534 = vtanh.pop %v465
        %v535 = vtanh.pop %v467
        %v536 = vtanh.pop %v518
        %v537 = vtanh.pop %v520
        %v538 = vpack.c.bf16 %v526, %v522
        %v539 = vpack.c.bf16 %v527, %v523
        %v540 = vpack.c.bf16 %v528, %v524
        %v541 = vpack.c.bf16 %v529, %v525
        %v542 = vpack.c.bf16 %v534, %v530
        %v543 = vpack.c.bf16 %v535, %v531
        %v544 = vpack.c.bf16 %v536, %v532
        %v545 = vpack.c.bf16 %v537, %v533
        %v546 = vld [vmem:[#allocation3] sm:$0xff]
        %v547 = vld [vmem:[#allocation3 + $0x8] sm:$0xff]
        %v548 = vld [vmem:[#allocation3 + $0x10] sm:$0xff]
        %v549 = vld [vmem:[#allocation3 + $0x18] sm:$0xff]
        %v550 = vld [vmem:[#allocation3 + $0x20] sm:$0xff]
        %v551 = vld [vmem:[#allocation3 + $0x28] sm:$0xff]
        %v552 = vld [vmem:[#allocation3 + $0x30] sm:$0xff]
        %v553 = vld [vmem:[#allocation3 + $0x38] sm:$0xff]
        %v554 = vld [vmem:[#allocation3 + $0x40] sm:$0xff]
        %v555 = vld [vmem:[#allocation3 + $0x48] sm:$0xff]
        %v556 = vld [vmem:[#allocation3 + $0x50] sm:$0xff]
        %v557 = vld [vmem:[#allocation3 + $0x58] sm:$0xff]
        %v558 = vld [vmem:[#allocation3 + $0x60] sm:$0xff]
        %v559 = vld [vmem:[#allocation3 + $0x68] sm:$0xff]
        %v560 = vld [vmem:[#allocation3 + $0x70] sm:$0xff]
        %v561 = vld [vmem:[#allocation3 + $0x78] sm:$0xff]
        %v562 = vld [vmem:[#allocation3 + $0x80] sm:$0xff]
        %v563 = vld [vmem:[#allocation3 + $0x88] sm:$0xff]
        %v564 = vld [vmem:[#allocation3 + $0x90] sm:$0xff]
        %v565 = vld [vmem:[#allocation3 + $0x98] sm:$0xff]
        %v566 = vld [vmem:[#allocation3 + $0xa0] sm:$0xff]
        %v567 = vld [vmem:[#allocation3 + $0xa8] sm:$0xff]
        %v568 = vld [vmem:[#allocation3 + $0xb0] sm:$0xff]
        %v569 = vld [vmem:[#allocation3 + $0xb8] sm:$0xff]
        %v570 = vld [vmem:[#allocation3 + $0xc0] sm:$0xff]
        %v571 = vld [vmem:[#allocation3 + $0xc8] sm:$0xff]
        %v572 = vld [vmem:[#allocation3 + $0xd0] sm:$0xff]
        %v573 = vld [vmem:[#allocation3 + $0xd8] sm:$0xff]
        %v574 = vld [vmem:[#allocation3 + $0xe0] sm:$0xff]
        %v575 = vld [vmem:[#allocation3 + $0xe8] sm:$0xff]
        %v576 = vld [vmem:[#allocation3 + $0xf0] sm:$0xff]
        %v577 = vld [vmem:[#allocation3 + $0xf8] sm:$0xff]
        %v578 = vld [vmem:[#allocation3 + $0x100] sm:$0xff]
        %v579 = vld [vmem:[#allocation3 + $0x108] sm:$0xff]
        %v580 = vld [vmem:[#allocation3 + $0x110] sm:$0xff]
        %v581 = vld [vmem:[#allocation3 + $0x118] sm:$0xff]
        %v582 = vld [vmem:[#allocation3 + $0x120] sm:$0xff]
        %v583 = vld [vmem:[#allocation3 + $0x128] sm:$0xff]
        %v584 = vld [vmem:[#allocation3 + $0x130] sm:$0xff]
        %v585 = vld [vmem:[#allocation3 + $0x138] sm:$0xff]
        %v586 = vld [vmem:[#allocation3 + $0x140] sm:$0xff]
        %v587 = vld [vmem:[#allocation3 + $0x148] sm:$0xff]
        %v588 = vld [vmem:[#allocation3 + $0x150] sm:$0xff]
        %v589 = vld [vmem:[#allocation3 + $0x158] sm:$0xff]
        %v590 = vld [vmem:[#allocation3 + $0x160] sm:$0xff]
        %v591 = vld [vmem:[#allocation3 + $0x168] sm:$0xff]
        %v592 = vld [vmem:[#allocation3 + $0x170] sm:$0xff]
        %v593 = vld [vmem:[#allocation3 + $0x178] sm:$0xff]
        %v594 = vld [vmem:[#allocation3 + $0x180] sm:$0xff]
        %v595 = vld [vmem:[#allocation3 + $0x188] sm:$0xff]
        %v596 = vld [vmem:[#allocation3 + $0x190] sm:$0xff]
        %v597 = vld [vmem:[#allocation3 + $0x198] sm:$0xff]
        %v598 = vld [vmem:[#allocation3 + $0x1a0] sm:$0xff]
        %v599 = vld [vmem:[#allocation3 + $0x1a8] sm:$0xff]
        %v600 = vld [vmem:[#allocation3 + $0x1b0] sm:$0xff]
        %v601 = vld [vmem:[#allocation3 + $0x1b8] sm:$0xff]
        %v602 = vld [vmem:[#allocation3 + $0x1c0] sm:$0xff]
        %v603 = vld [vmem:[#allocation3 + $0x1c8] sm:$0xff]
        %v604 = vld [vmem:[#allocation3 + $0x1d0] sm:$0xff]
        %v605 = vld [vmem:[#allocation3 + $0x1d8] sm:$0xff]
        %v606 = vld [vmem:[#allocation3 + $0x1e0] sm:$0xff]
        %v607 = vld [vmem:[#allocation3 + $0x1e8] sm:$0xff]
        %v608 = vld [vmem:[#allocation3 + $0x1f0] sm:$0xff]
        %v609 = vld [vmem:[#allocation3 + $0x1f8] sm:$0xff]
        %v610 = vld [vmem:[%s4] sm:$0x3]
        %v612 = vlaneseq
        %v613 = vshrl.u32 %v612, 7
        %v614 = vsub.s32 0, %v613
        %v615 = vrot.slane %v610, %v614
        %v616 = vlaneseq
        %v617 = vshrl.u32 %v616, 7
        %v618 = vsub.s32 1, %v617
        %v619 = vrot.slane %v610, %v618
        %v686 = vunpack.c.l.b16 %v546
        %v687 = vunpack.c.h.b16 %v546
        %v688 = vunpack.c.l.b16 %v547
        %v689 = vunpack.c.h.b16 %v547
        %v690 = vunpack.c.l.b16 %v548
        %v691 = vunpack.c.h.b16 %v548
        %v692 = vunpack.c.l.b16 %v549
        %v693 = vunpack.c.h.b16 %v549
        %v694 = vunpack.c.l.b16 %v550
        %v695 = vunpack.c.h.b16 %v550
        %v696 = vunpack.c.l.b16 %v551
        %v697 = vunpack.c.h.b16 %v551
        %v698 = vunpack.c.l.b16 %v552
        %v699 = vunpack.c.h.b16 %v552
        %v700 = vunpack.c.l.b16 %v553
        %v701 = vunpack.c.h.b16 %v553
        %v702 = vunpack.c.l.b16 %v554
        %v703 = vunpack.c.h.b16 %v554
        %v704 = vunpack.c.l.b16 %v555
        %v705 = vunpack.c.h.b16 %v555
        %v706 = vunpack.c.l.b16 %v556
        %v707 = vunpack.c.h.b16 %v556
        %v708 = vunpack.c.l.b16 %v557
        %v709 = vunpack.c.h.b16 %v557
        %v710 = vunpack.c.l.b16 %v558
        %v711 = vunpack.c.h.b16 %v558
        %v712 = vunpack.c.l.b16 %v559
        %v713 = vunpack.c.h.b16 %v559
        %v714 = vunpack.c.l.b16 %v560
        %v715 = vunpack.c.h.b16 %v560
        %v716 = vunpack.c.l.b16 %v561
        %v717 = vunpack.c.h.b16 %v561
        %v718 = vunpack.c.l.b16 %v562
        %v719 = vunpack.c.h.b16 %v562
        %v720 = vunpack.c.l.b16 %v563
        %v721 = vunpack.c.h.b16 %v563
        %v722 = vunpack.c.l.b16 %v564
        %v723 = vunpack.c.h.b16 %v564
        %v724 = vunpack.c.l.b16 %v565
        %v725 = vunpack.c.h.b16 %v565
        %v726 = vunpack.c.l.b16 %v566
        %v727 = vunpack.c.h.b16 %v566
        %v728 = vunpack.c.l.b16 %v567
        %v729 = vunpack.c.h.b16 %v567
        %v730 = vunpack.c.l.b16 %v568
        %v731 = vunpack.c.h.b16 %v568
        %v732 = vunpack.c.l.b16 %v569
        %v733 = vunpack.c.h.b16 %v569
        %v734 = vunpack.c.l.b16 %v570
        %v735 = vunpack.c.h.b16 %v570
        %v736 = vunpack.c.l.b16 %v571
        %v737 = vunpack.c.h.b16 %v571
        %v738 = vunpack.c.l.b16 %v572
        %v739 = vunpack.c.h.b16 %v572
        %v740 = vunpack.c.l.b16 %v573
        %v741 = vunpack.c.h.b16 %v573
        %v742 = vunpack.c.l.b16 %v574
        %v743 = vunpack.c.h.b16 %v574
        %v744 = vunpack.c.l.b16 %v575
        %v745 = vunpack.c.h.b16 %v575
        %v746 = vunpack.c.l.b16 %v576
        %v747 = vunpack.c.h.b16 %v576
        %v748 = vunpack.c.l.b16 %v577
        %v749 = vunpack.c.h.b16 %v577
        %v750 = vunpack.c.l.b16 %v578
        %v751 = vunpack.c.h.b16 %v578
        %v752 = vunpack.c.l.b16 %v579
        %v753 = vunpack.c.h.b16 %v579
        %v754 = vunpack.c.l.b16 %v580
        %v755 = vunpack.c.h.b16 %v580
        %v756 = vunpack.c.l.b16 %v581
        %v757 = vunpack.c.h.b16 %v581
        %v758 = vunpack.c.l.b16 %v582
        %v759 = vunpack.c.h.b16 %v582
        %v760 = vunpack.c.l.b16 %v583
        %v761 = vunpack.c.h.b16 %v583
        %v762 = vunpack.c.l.b16 %v584
        %v763 = vunpack.c.h.b16 %v584
        %v764 = vunpack.c.l.b16 %v585
        %v765 = vunpack.c.h.b16 %v585
        %v766 = vunpack.c.l.b16 %v586
        %v767 = vunpack.c.h.b16 %v586
        %v768 = vunpack.c.l.b16 %v587
        %v769 = vunpack.c.h.b16 %v587
        %v770 = vunpack.c.l.b16 %v588
        %v771 = vunpack.c.h.b16 %v588
        %v772 = vunpack.c.l.b16 %v589
        %v773 = vunpack.c.h.b16 %v589
        %v774 = vunpack.c.l.b16 %v590
        %v775 = vunpack.c.h.b16 %v590
        %v776 = vunpack.c.l.b16 %v591
        %v777 = vunpack.c.h.b16 %v591
        %v778 = vunpack.c.l.b16 %v592
        %v779 = vunpack.c.h.b16 %v592
        %v780 = vunpack.c.l.b16 %v593
        %v781 = vunpack.c.h.b16 %v593
        %v782 = vunpack.c.l.b16 %v594
        %v783 = vunpack.c.h.b16 %v594
        %v784 = vunpack.c.l.b16 %v595
        %v785 = vunpack.c.h.b16 %v595
        %v786 = vunpack.c.l.b16 %v596
        %v787 = vunpack.c.h.b16 %v596
        %v788 = vunpack.c.l.b16 %v597
        %v789 = vunpack.c.h.b16 %v597
        %v790 = vunpack.c.l.b16 %v598
        %v791 = vunpack.c.h.b16 %v598
        %v792 = vunpack.c.l.b16 %v599
        %v793 = vunpack.c.h.b16 %v599
        %v794 = vunpack.c.l.b16 %v600
        %v795 = vunpack.c.h.b16 %v600
        %v796 = vunpack.c.l.b16 %v601
        %v797 = vunpack.c.h.b16 %v601
        %v798 = vunpack.c.l.b16 %v602
        %v799 = vunpack.c.h.b16 %v602
        %v800 = vunpack.c.l.b16 %v603
        %v801 = vunpack.c.h.b16 %v603
        %v802 = vunpack.c.l.b16 %v604
        %v803 = vunpack.c.h.b16 %v604
        %v804 = vunpack.c.l.b16 %v605
        %v805 = vunpack.c.h.b16 %v605
        %v806 = vunpack.c.l.b16 %v606
        %v807 = vunpack.c.h.b16 %v606
        %v808 = vunpack.c.l.b16 %v607
        %v809 = vunpack.c.h.b16 %v607
        %v810 = vunpack.c.l.b16 %v608
        %v811 = vunpack.c.h.b16 %v608
        %v812 = vunpack.c.l.b16 %v609
        %v813 = vunpack.c.h.b16 %v609
        %v814 = vpack.c.b16 %v688, %v686
        %v815 = vpack.c.b16 %v689, %v687
        %v816 = vpack.c.b16 %v692, %v690
        %v817 = vpack.c.b16 %v693, %v691
        %v818 = vpack.c.b16 %v696, %v694
        %v819 = vpack.c.b16 %v697, %v695
        %v820 = vpack.c.b16 %v700, %v698
        %v821 = vpack.c.b16 %v701, %v699
        %v822 = vpack.c.b16 %v704, %v702
        %v823 = vpack.c.b16 %v705, %v703
        %v824 = vpack.c.b16 %v708, %v706
        %v825 = vpack.c.b16 %v709, %v707
        %v826 = vpack.c.b16 %v712, %v710
        %v827 = vpack.c.b16 %v713, %v711
        %v828 = vpack.c.b16 %v716, %v714
        %v829 = vpack.c.b16 %v717, %v715
        %v830 = vpack.c.b16 %v720, %v718
        %v831 = vpack.c.b16 %v721, %v719
        %v832 = vpack.c.b16 %v724, %v722
        %v833 = vpack.c.b16 %v725, %v723
        %v834 = vpack.c.b16 %v728, %v726
        %v835 = vpack.c.b16 %v729, %v727
        %v836 = vpack.c.b16 %v732, %v730
        %v837 = vpack.c.b16 %v733, %v731
        %v838 = vpack.c.b16 %v736, %v734
        %v839 = vpack.c.b16 %v737, %v735
        %v840 = vpack.c.b16 %v740, %v738
        %v841 = vpack.c.b16 %v741, %v739
        %v842 = vpack.c.b16 %v744, %v742
        %v843 = vpack.c.b16 %v745, %v743
        %v844 = vpack.c.b16 %v748, %v746
        %v845 = vpack.c.b16 %v749, %v747
        %v846 = vpack.c.b16 %v752, %v750
        %v847 = vpack.c.b16 %v753, %v751
        %v848 = vpack.c.b16 %v756, %v754
        %v849 = vpack.c.b16 %v757, %v755
        %v850 = vpack.c.b16 %v760, %v758
        %v851 = vpack.c.b16 %v761, %v759
        %v852 = vpack.c.b16 %v764, %v762
        %v853 = vpack.c.b16 %v765, %v763
        %v854 = vpack.c.b16 %v768, %v766
        %v855 = vpack.c.b16 %v769, %v767
        %v856 = vpack.c.b16 %v772, %v770
        %v857 = vpack.c.b16 %v773, %v771
        %v858 = vpack.c.b16 %v776, %v774
        %v859 = vpack.c.b16 %v777, %v775
        %v860 = vpack.c.b16 %v780, %v778
        %v861 = vpack.c.b16 %v781, %v779
        %v862 = vpack.c.b16 %v784, %v782
        %v863 = vpack.c.b16 %v785, %v783
        %v864 = vpack.c.b16 %v788, %v786
        %v865 = vpack.c.b16 %v789, %v787
        %v866 = vpack.c.b16 %v792, %v790
        %v867 = vpack.c.b16 %v793, %v791
        %v868 = vpack.c.b16 %v796, %v794
        %v869 = vpack.c.b16 %v797, %v795
        %v870 = vpack.c.b16 %v800, %v798
        %v871 = vpack.c.b16 %v801, %v799
        %v872 = vpack.c.b16 %v804, %v802
        %v873 = vpack.c.b16 %v805, %v803
        %v874 = vpack.c.b16 %v808, %v806
        %v875 = vpack.c.b16 %v809, %v807
        %v876 = vpack.c.b16 %v812, %v810
        %v877 = vpack.c.b16 %v813, %v811
        %942 = vmatprep.subr.bf16.mxu0 %v829
        %943 = vmatpush1.bf16.msra.mxu0 %v828
        %944 = vmatprep.subr.bf16.mxu0 %v827
        %945 = vmatpush1.bf16.msra.mxu0 %v826
        %946 = vmatprep.subr.bf16.mxu0 %v825
        %947 = vmatpush1.bf16.msra.mxu0 %v824
        %948 = vmatprep.subr.bf16.mxu0 %v823
        %949 = vmatpush1.bf16.msra.mxu0 %v822
        %950 = vmatprep.subr.bf16.mxu0 %v821
        %951 = vmatpush1.bf16.msra.mxu0 %v820
        %952 = vmatprep.subr.bf16.mxu0 %v819
        %953 = vmatpush1.bf16.msra.mxu0 %v818
        %954 = vmatprep.subr.bf16.mxu0 %v817
        %955 = vmatpush1.bf16.msra.mxu0 %v816
        %956 = vmatprep.subr.bf16.mxu0 %v815
        %957 = vmatpush1.bf16.msra.mxu0 %v814
        %958 = vmatprep.subr.bf16.mxu0 %v845
        %959 = vmatpush2.bf16.msra.mxu0 %v844
        %960 = vmatprep.subr.bf16.mxu0 %v843
        %961 = vmatpush2.bf16.msra.mxu0 %v842
        %962 = vmatprep.subr.bf16.mxu0 %v841
        %963 = vmatpush2.bf16.msra.mxu0 %v840
        %964 = vmatprep.subr.bf16.mxu0 %v839
        %965 = vmatpush2.bf16.msra.mxu0 %v838
        %966 = vmatprep.subr.bf16.mxu0 %v837
        %967 = vmatpush2.bf16.msra.mxu0 %v836
        %968 = vmatprep.subr.bf16.mxu0 %v835
        %969 = vmatpush2.bf16.msra.mxu0 %v834
        %970 = vmatprep.subr.bf16.mxu0 %v833
        %971 = vmatpush2.bf16.msra.mxu0 %v832
        %972 = vmatprep.subr.bf16.mxu0 %v831
        %973 = vmatpush2.bf16.msra.mxu0 %v830
        %974 = vmatprep.mubr.bf16.mxu0 %v539
        %975 = vmatmul.mubr.bf16.gmra.mxu0 %v538
        %v976 = vpop.f32.mrf.mxu0
        %v977 = vadd.f32 %v615, %v976
        %v978 = vpop.f32.mrf.mxu0
        %v979 = vadd.f32 %v619, %v978
        %v980 = vpop.f32.mrf.mxu0
        %v981 = vadd.f32 %v615, %v980
        %v982 = vpop.f32.mrf.mxu0
        %v983 = vadd.f32 %v619, %v982
        %984 = vmatprep.mubr.bf16.mxu0 %v543
        %985 = vmatmul.mubr.bf16.gmra.mxu0 %v542
        %v986 = vpop.f32.mrf.mxu0
        %v987 = vadd.f32 %v615, %v986
        %v988 = vpop.f32.mrf.mxu0
        %v989 = vadd.f32 %v619, %v988
        %v990 = vpop.f32.mrf.mxu0
        %v991 = vadd.f32 %v615, %v990
        %v992 = vpop.f32.mrf.mxu0
        %v993 = vadd.f32 %v619, %v992
        %994 = vdwg.mxu0
        %995 = vmatprep.subr.bf16.mxu0 %v861
        %996 = vmatpush1.bf16.msra.mxu0 %v860
        %997 = vmatprep.subr.bf16.mxu0 %v859
        %998 = vmatpush1.bf16.msra.mxu0 %v858
        %999 = vmatprep.subr.bf16.mxu0 %v857
        %1000 = vmatpush1.bf16.msra.mxu0 %v856
        %1001 = vmatprep.subr.bf16.mxu0 %v855
        %1002 = vmatpush1.bf16.msra.mxu0 %v854
        %1003 = vmatprep.subr.bf16.mxu0 %v853
        %1004 = vmatpush1.bf16.msra.mxu0 %v852
        %1005 = vmatprep.subr.bf16.mxu0 %v851
        %1006 = vmatpush1.bf16.msra.mxu0 %v850
        %1007 = vmatprep.subr.bf16.mxu0 %v849
        %1008 = vmatpush1.bf16.msra.mxu0 %v848
        %1009 = vmatprep.subr.bf16.mxu0 %v847
        %1010 = vmatpush1.bf16.msra.mxu0 %v846
        %1011 = vmatprep.subr.bf16.mxu0 %v877
        %1012 = vmatpush2.bf16.msra.mxu0 %v876
        %1013 = vmatprep.subr.bf16.mxu0 %v875
        %1014 = vmatpush2.bf16.msra.mxu0 %v874
        %1015 = vmatprep.subr.bf16.mxu0 %v873
        %1016 = vmatpush2.bf16.msra.mxu0 %v872
        %1017 = vmatprep.subr.bf16.mxu0 %v871
        %1018 = vmatpush2.bf16.msra.mxu0 %v870
        %1019 = vmatprep.subr.bf16.mxu0 %v869
        %1020 = vmatpush2.bf16.msra.mxu0 %v868
        %1021 = vmatprep.subr.bf16.mxu0 %v867
        %1022 = vmatpush2.bf16.msra.mxu0 %v866
        %1023 = vmatprep.subr.bf16.mxu0 %v865
        %1024 = vmatpush2.bf16.msra.mxu0 %v864
        %1025 = vmatprep.subr.bf16.mxu0 %v863
        %1026 = vmatpush2.bf16.msra.mxu0 %v862
        %1027 = vmatprep.mubr.bf16.mxu0 %v541
        %1028 = vmatmul.mubr.bf16.gmra.mxu0 %v540
        %v1029 = vpop.f32.mrf.mxu0
        %v1030 = vadd.f32 %v977, %v1029
        %v1031 = vpop.f32.mrf.mxu0
        %v1032 = vadd.f32 %v979, %v1031
        %v1033 = vpop.f32.mrf.mxu0
        %v1034 = vadd.f32 %v981, %v1033
        %v1035 = vpop.f32.mrf.mxu0
        %v1036 = vadd.f32 %v983, %v1035
        %1037 = vmatprep.mubr.bf16.mxu0 %v545
        %1038 = vmatmul.mubr.bf16.gmra.mxu0 %v544
        %v1039 = vpop.f32.mrf.mxu0
        %v1040 = vadd.f32 %v987, %v1039
        %v1041 = vpop.f32.mrf.mxu0
        %v1042 = vadd.f32 %v989, %v1041
        %v1043 = vpop.f32.mrf.mxu0
        %v1044 = vadd.f32 %v991, %v1043
        %v1045 = vpop.f32.mrf.mxu0
        %v1046 = vadd.f32 %v993, %v1045
        %1047 = vdwg.mxu0
        %v1048 = vtanh.pop %v1030
        %v1049 = vtanh.pop %v1032
        %v1050 = vtanh.pop %v1034
        %v1051 = vtanh.pop %v1036
        %v1052 = vtanh.pop %v1040
        %v1053 = vtanh.pop %v1042
        %v1054 = vtanh.pop %v1044
        %v1055 = vtanh.pop %v1046
        %v1056 = vld [vmem:[%s5] sm:$0x3]
        %v1058 = vlaneseq
        %v1059 = vshrl.u32 %v1058, 7
        %v1060 = vsub.s32 0, %v1059
        %v1061 = vrot.slane %v1056, %v1060
        %v1062 = vlaneseq
        %v1063 = vshrl.u32 %v1062, 7
        %v1064 = vsub.s32 1, %v1063
        %v1065 = vrot.slane %v1056, %v1064
        %v1068 = vmul.f32 %v1048, %v1061
        %v1069 = vmul.f32 %v1049, %v1065
        %v1070 = vmul.f32 %v1050, %v1061
        %v1071 = vmul.f32 %v1051, %v1065
        %v1072 = vmul.f32 %v1052, %v1061
        %v1073 = vmul.f32 %v1053, %v1065
        %v1074 = vmul.f32 %v1054, %v1061
        %v1075 = vmul.f32 %v1055, %v1065
        %v1076 = vadd.f32 %v1068, %v1069
        %1077 = vadd.xlane.f32.xlu0 %v1076
        %v1078 = vpop.xlane.xlu0 %1077
        %v1079 = vadd.f32 %v1070, %v1071
        %1080 = vadd.xlane.f32.xlu0 %v1079
        %v1081 = vpop.xlane.xlu0 %1080
        %v1082 = vadd.f32 %v1072, %v1073
        %1083 = vadd.xlane.f32.xlu0 %v1082
        %v1084 = vpop.xlane.xlu0 %1083
        %v1085 = vadd.f32 %v1074, %v1075
        %1086 = vadd.xlane.f32.xlu0 %v1085
        %v1087 = vpop.xlane.xlu0 %1086
        %v1088 = vld [vmem:[#allocation2] sm:$0x1]
        %v1090 = vlaneseq
        %v1091 = vshrl.u32 %v1090, 7
        %v1092 = vsub.s32 0, %v1091
        %v1093 = vrot.slane %v1088, %v1092
        %v1095 = vadd.f32 %v1078, %v1093
        %v1096 = vadd.f32 %v1081, %v1093
        %v1097 = vadd.f32 %v1084, %v1093
        %v1098 = vadd.f32 %v1087, %v1093
        %v1099 = vmul.f32 %v1095, 0.5
        %v1100 = vmul.f32 %v1096, 0.5
        %v1101 = vmul.f32 %v1097, 0.5
        %v1102 = vmul.f32 %v1098, 0.5
        %v1103 = vtanh.pop %v1099
        %v1104 = vtanh.pop %v1100
        %v1105 = vtanh.pop %v1101
        %v1106 = vtanh.pop %v1102
        %v1107 = vadd.f32 %v1103, 1.0
        %v1108 = vadd.f32 %v1104, 1.0
        %v1109 = vadd.f32 %v1105, 1.0
        %v1110 = vadd.f32 %v1106, 1.0
        %v1111 = vmul.f32 %v1107, 0.5
        %v1112 = vmul.f32 %v1108, 0.5
        %v1113 = vmul.f32 %v1109, 0.5
        %v1114 = vmul.f32 %v1110, 0.5
        %vm1115 = vcmask 7168
        %1116 = vst.msk [vmem:[%s297] sm:$0xff] %vm1115, %v1111
        %1117 = vst.msk [vmem:[%s297 + $0x8] sm:$0xff] %vm1115, %v1112
        %1118 = vst.msk [vmem:[%s297 + $0x10] sm:$0xff] %vm1115, %v1113
        %1119 = vst.msk [vmem:[%s297 + $0x18] sm:$0xff] %vm1115, %v1114
        %s1120 = smul.u32 4, %s21
        %p1121 = scmp.lt.s32.totalorder %s1120, 7
        %s1122 = scalar_select %p1121, %s1120, 7
        %s1123 = smul.addr %s1122, 8
        %s1124 = scalar_lea.vmem %s7, %s1123
        // Predicated region
        $region53: #{tpu_custom_call.1} parent=47 // pred_check
          %p1125 = pneg %p191
        $region54: #{tpu_custom_call.1} parent=47 // pred_check_branch
          %1127 = sbr.rel (%p1125) target = $region56
        $region55: #{tpu_custom_call.1} parent=47 // pred_region
          %s1128 = smul.u32 4, %s21
        $region56: #{tpu_custom_call.1} parent=47 // pred_fallthru
          _
      $region48: #{tpu_custom_call.1} parent=5 // pred_fallthru
        _
      %p1129 = scmp.le.s32.totalorder 2, %s16
      // Predicated region
      $region57: #{tpu_custom_call.1} parent=5 // pred_check
        %p1130 = pneg %p1129
      $region58: #{tpu_custom_call.1} parent=5 // pred_check_branch
        %1132 = sbr.rel (%p1130) target = $region60
      $region59: #{tpu_custom_call.1} parent=5 // pred_region
        %s1133 = ssub.s32 %s16, 2
        // Predicated region
        $region61: #{tpu_custom_call.1} parent=59 // pred_check
          %p1134 = pneg %p197
        $region62: #{tpu_custom_call.1} parent=59 // pred_check_branch
          %1136 = sbr.rel (%p1134) target = $region64
        $region63: #{tpu_custom_call.1} parent=59 // pred_region
          %s1137 = smul.u32 4, %s22
          %p1138 = scmp.lt.s32.totalorder %s1137, 7
          %s1139 = scalar_select %p1138, %s1137, 7
          %s1140 = smul.addr %s1139, 8
          %s1141 = scalar_lea.vmem %s7, %s1140
        $region64: #{tpu_custom_call.1} parent=59 // pred_fallthru
          _
      $region60: #{tpu_custom_call.1} parent=5 // pred_fallthru
        _
    $region6: #{tpu_custom_call.1} parent=1 // loop_footer
      %s20 = sadd.s32 1, %s16
    $region7: #{tpu_custom_call.1} parent=1 // loop_footer_branch
      %15 = sbr.rel target = $region3
    $region8: #{tpu_custom_call.1} parent=1 // loop_exit
      _
    %1142 = vsyncpa [#allocation4], 1
    %s1143 = scalar_lea.sflag [#allocation4], 1
    %1144 = vsyncpa %s1143, 1

</llo_original>
